<compile_context>
chip_gen: v7x
topology: tpu7x:2x2x1
jax: 0.10.0
libtpu: 0.0.40
codegen_flags: <defaults>
</compile_context>

<pallas_src>
import jax
import jax.numpy as jnp
from jax.experimental import pallas as pl
from jax.experimental.pallas import tpu as pltpu


def _min_identity(dtype):
    if jnp.issubdtype(dtype, jnp.floating):
        return float("inf")
    if jnp.issubdtype(dtype, jnp.integer):
        return int(jnp.iinfo(dtype).max)
    return True  # bool: identity of min is True


def _input_tile_budget_bytes():
    # ~8 MiB per (double-buffered) input block; a bit smaller on v7x where
    # physical VMEM per TensorCore is 64 MiB (vs 128 MiB on v5e/v6e).
    try:
        info = pltpu.get_tpu_info()
        vmem = getattr(info, "vmem_capacity_bytes", None)
        if vmem is not None and vmem <= (64 << 20):
            return 6 << 20
    except Exception:
        pass
    return 8 << 20


def _make_kernel(seq_len, ts_block, sub, ragged, ident):
    def kernel(x_ref, o_ref):
        s = pl.program_id(2)
        x = x_ref[...]                       # (TB, TS, TH)
        tb, ts, th = x.shape                 # static Python ints

        if ragged:
            # The last S tile reads past the end of the array; out-of-bounds
            # lanes are unspecified, so replace them with the min-identity.
            # For non-last tiles `limit >= ts` and the select is a no-op;
            # either way the VPU work hides under the DMA stream.
            limit = seq_len - s * ts_block
            idx = jax.lax.broadcasted_iota(jnp.int32, (tb, ts, th), 1)
            x = jnp.where(idx < limit, x, jnp.asarray(ident, dtype=x.dtype))

        if ts % sub == 0 and ts > sub:
            # Fold most of the reduction as elementwise (VPU) minimums across
            # sublane slabs matching the dtype's native packing; only the
            # final `sub`-wide reduce touches the XLU.
            xr = x.reshape(tb, ts // sub, sub, th)
            tile_min = jnp.min(jnp.min(xr, axis=1), axis=1)   # (TB, TH)
        else:
            tile_min = jnp.min(x, axis=1)                     # (TB, TH)

        @pl.when(s == 0)
        def _init():
            o_ref[...] = tile_min

        @pl.when(s > 0)
        def _accumulate():
            o_ref[...] = jnp.minimum(o_ref[...], tile_min)

    return kernel


def min_readout(seq: jax.Array) -> jax.Array:
    """Pallas equivalent of torch.min(seq, 1).values for a (B, S, H) input."""
    B, S, H = seq.shape
    dtype = seq.dtype
    itemsize = jnp.dtype(dtype).itemsize

    # Sublane packing multiple: 8 for 32-bit, 16 for 16-bit, 32 for 8-bit.
    sub = 8 * max(1, 4 // itemsize)

    # ---- Lane-dense folding for narrow H (layout-only reshape) ------------
    k = 1
    if H < 128 and 128 % H == 0 and (128 // H) > 1 and S % (128 // H) == 0:
        k = 128 // H
    Seff, Heff = S // k, H * k
    x = seq.reshape(B, Seff, Heff) if k > 1 else seq

    # ---- Tile selection ----------------------------------------------------
    budget = _input_tile_budget_bytes()

    # Batch tile: output sublane dim must be a multiple of `sub` or full B.
    TB = sub if B % sub == 0 else B
    gb = (B // TB) if B % sub == 0 else 1

    # H tile: full Heff unless the batch axis has extent 1 and H can be split
    # into 128-multiples, so both v7x TensorCores get work.
    TH = Heff
    if gb < 2 and Heff % 256 == 0:
        TH = Heff // 2

    # Sequence tile: fill the per-buffer budget; multiple of the sublane
    # packing or the full reduced axis.
    row_bytes = TB * TH * itemsize
    ts = budget // max(1, row_bytes)
    ts = max(sub, (ts // sub) * sub)
    if ts >= Seff:
        TS = Seff
        # Whole reduced axis fits in one block: grow the batch tile into the
        # leftover budget, but keep >= 2 batch blocks for megacore sharding.
        if B % sub == 0 and TB < B:
            tb = TB
            while True:
                nb = tb * 2
                if nb > B or B % nb != 0:
                    break
                if nb * Seff * TH * itemsize > budget:
                    break
                if B // nb < 2 and B // tb >= 2:
                    break
                tb = nb
            TB = tb
    else:
        TS = ts

    grid = (B // TB, Heff // TH, pl.cdiv(Seff, TS))
    ragged = (Seff % TS) != 0
    ident = _min_identity(dtype)

    in_block_bytes = TB * TS * TH * itemsize
    out_block_bytes = TB * TH * itemsize
    vmem_needed = 2 * in_block_bytes + 2 * out_block_bytes + (2 << 20)
    # Raise above v5e's 16 MiB default; stays well under v7x's 64 MiB VMEM.
    vmem_limit = int(min(max(vmem_needed, 32 << 20), 48 << 20))

    cost = pl.CostEstimate(
        flops=0,  # min-reduction has no MACs
        transcendentals=0,
        bytes_accessed=(B * Seff * Heff + B * Heff) * itemsize,
    )

    out = pl.pallas_call(
        _make_kernel(Seff, TS, sub, ragged, ident),
        out_shape=jax.ShapeDtypeStruct((B, Heff), dtype),
        grid=grid,
        in_specs=[pl.BlockSpec((TB, TS, TH), lambda b, h, s: (b, s, h))],
        out_specs=pl.BlockSpec((TB, TH), lambda b, h, s: (b, h)),
        compiler_params=pltpu.CompilerParams(
            dimension_semantics=("parallel", "parallel", "arbitrary"),
            vmem_limit_bytes=vmem_limit,
        ),
        cost_estimate=cost,
    )(x)

    if k > 1:
        # Fold the k lane groups back down to H (tiny (B, k, H) min in XLA).
        out = jnp.min(out.reshape(B, k, H), axis=1)
    return out


if __name__ == "__main__":
    # MinReadout has no parameters; just build deterministic inputs.
    key = jax.random.PRNGKey(0)

    # Small shape matching the module's forward: (batch, seq, hidden).
    B, S, H = 2, 8, 32
    seq = jax.random.normal(key, (B, S, H), dtype=jnp.float32)
    out = jax.block_until_ready(min_readout(seq))
    ref = jnp.min(seq, axis=1)
    assert out.shape == (B, H), out.shape
    assert jnp.allclose(out, ref), "mismatch vs reference (small shape)"

    # Larger shape exercising multiple S grid steps and the in-kernel masking
    # of a ragged last tile (no wrapper-side padding pass).
    key2 = jax.random.PRNGKey(1)
    B2, S2, H2 = 8, 2500, 128
    seq2 = jax.random.normal(key2, (B2, S2, H2), dtype=jnp.float32)
    out2 = jax.block_until_ready(min_readout(seq2))
    ref2 = jnp.min(seq2, axis=1)
    assert out2.shape == (B2, H2), out2.shape
    assert jnp.allclose(out2, ref2), "mismatch vs reference (ragged tiled shape)"

    print("KERNEL_OK")
</pallas_src>

<mosaic_0001>
module attributes {stable_mosaic.version = 11 : i64} {
  func.func @kernel(%arg0: i32, %arg1: i32, %arg2: i32, %arg3: memref<2x2x128xf32, #tpu.memory_space<vmem>>, %arg4: memref<2x128xf32, #tpu.memory_space<vmem>>) attributes {dimension_semantics = [#tpu.dimension_semantics<parallel>, #tpu.dimension_semantics<parallel>, #tpu.dimension_semantics<arbitrary>], iteration_bounds = array<i64: 1, 1, 1>, scalar_prefetch = 0 : i64, scratch_operands = 0 : i64, tpu.core_type = #tpu.core_type<tc>, window_params = [{transform_indices = @transform_0, window_bounds = array<i64: 2, 2, 128>}, {transform_indices = @transform_1, window_bounds = array<i64: 2, 128>}]} {
    %c0 = arith.constant 0 : index
    %c0_0 = arith.constant 0 : index
    %c0_1 = arith.constant 0 : index
    %0 = vector.load %arg3[%c0, %c0_0, %c0_1] : memref<2x2x128xf32, #tpu.memory_space<vmem>>, vector<2x2x128xf32>
    %cst = arith.constant dense<0x7F800000> : vector<2x128xf32>
    %1 = vector.multi_reduction <minimumf>, %0, %cst [1] : vector<2x2x128xf32> to vector<2x128xf32>
    %c0_i32 = arith.constant 0 : i32
    %2 = arith.cmpi eq, %arg2, %c0_i32 : i32
    %3 = arith.extui %2 : i1 to i32
    %c0_i32_2 = arith.constant 0 : i32
    %4 = arith.cmpi ne, %3, %c0_i32_2 : i32
    scf.if %4 {
      %c0_5 = arith.constant 0 : index
      %c0_6 = arith.constant 0 : index
      %8 = vector.load %arg4[%c0_5, %c0_6] : memref<2x128xf32, #tpu.memory_space<vmem>>, vector<2x128xf32>
      tpu.vector_store %arg4[%c0_5, %c0_6], %1 {strides = array<i32>} : memref<2x128xf32, #tpu.memory_space<vmem>>, vector<2x128xf32>,
    } else {
    }
    %c0_i32_3 = arith.constant 0 : i32
    %5 = arith.cmpi sgt, %arg2, %c0_i32_3 : i32
    %6 = arith.extui %5 : i1 to i32
    %c0_i32_4 = arith.constant 0 : i32
    %7 = arith.cmpi ne, %6, %c0_i32_4 : i32
    scf.if %7 {
      %c0_5 = arith.constant 0 : index
      %c0_6 = arith.constant 0 : index
      %8 = vector.load %arg4[%c0_5, %c0_6] : memref<2x128xf32, #tpu.memory_space<vmem>>, vector<2x128xf32>
      %9 = arith.minimumf %8, %1 : vector<2x128xf32>
      %c0_7 = arith.constant 0 : index
      %c0_8 = arith.constant 0 : index
      %10 = vector.load %arg4[%c0_7, %c0_8] : memref<2x128xf32, #tpu.memory_space<vmem>>, vector<2x128xf32>
      tpu.vector_store %arg4[%c0_7, %c0_8], %9 {strides = array<i32>} : memref<2x128xf32, #tpu.memory_space<vmem>>, vector<2x128xf32>,
    } else {
    }
    return
  }
  func.func @transform_0(%arg0: i32, %arg1: i32, %arg2: i32) -> (i32, i32, i32) {
    %c0_i32 = arith.constant 0 : i32
    return %arg0, %arg2, %arg1 : i32, i32, i32
  }
  func.func @transform_1(%arg0: i32, %arg1: i32, %arg2: i32) -> (i32, i32) {
    %c0_i32 = arith.constant 0 : i32
    return %arg0, %arg1 : i32, i32
  }
}

</mosaic_0001>

<llo_original>
// kernel: tpu_custom_call.1
$region0: #{tpu_custom_call.1}
  #allocation0 [shape = 'u32[]', space=smem, size = 0x4, offset = 0x4, fixed_abs, tag = 'smem constant byte address 0x4 - core index']
  #allocation1 [shape = 'u32[144,128]{1,0:T(1,128)}', space=vmem, size = 0x12000, scoped, tag = 'internal scratch']
  %s0 = inlined_call_operand.hbm [shape: f32[2,2,128], index: 0, kind: input, shape index: {}]
  %s1 = inlined_call_operand.hbm [shape: f32[2,128], index: 1, kind: output, shape index: {}]
  %s2 = sld [smem:[#allocation0]]
  $region26: #{tpu_custom_call.1} parent=0
    _
  %s4 = ssub.s32 1, %s2
  %s5 = scalar_select 0, %s4, %s2
  $region1: #{tpu_custom_call.1} parent=0
    #allocation2 [shape = 'u8[2048]{0}', space=vmem, size = 0x800, scoped, tag = 'input window, operand 0, single buffered']
    #allocation3 [shape = 's32[1]{0}', space=sflag, size = 0x4, scoped, tag = 'scoped memory for tpu_custom_call.1']
    #allocation4 [shape = 's32[1]{0}', space=sflag, size = 0x4, scoped, tag = 'scoped memory for tpu_custom_call.1']
    #allocation5 [shape = 'u8[1024]{0}', space=vmem, size = 0x400, scoped, tag = 'output window, operand 0, single buffered']
    %6 = vsyncpa [#allocation3], 0
    %7 = vsyncpa [#allocation4], 0
    // Predicated region
    $region2: #{tpu_custom_call.1} parent=1 // pred_check
      _
    $region3: #{tpu_custom_call.1} parent=1 // pred_check_branch
      %9 = sbr.rel (0) target = $region5
    $region4: #{tpu_custom_call.1} parent=1 // pred_region
      %s11 = ssub.s32 64, 64
      %12 = vsyncadd [#allocation3], %s11
      %s13 = sshll.u32 [#allocation2], 4
      %s14 = int_to_ptr.vmem [resolvable:$true] %s13
      %19 = dma.hbm_to_vmem [thread:$0]  %s0, 64, %s14, [#allocation3], 32, 32, 2
    $region5: #{tpu_custom_call.1} parent=1 // pred_fallthru
      _
    // Predicated region
    $region6: #{tpu_custom_call.1} parent=1 // pred_check
      _
    $region7: #{tpu_custom_call.1} parent=1 // pred_check_branch
      %21 = sbr.rel (0) target = $region9
    $region8: #{tpu_custom_call.1} parent=1 // pred_region
      %22 = dma.done [#allocation3], 64
    $region9: #{tpu_custom_call.1} parent=1 // pred_fallthru
      _
    %v23 = vld [vmem:[#allocation2] sm:$0x3]
    %v24 = vld [vmem:[#allocation2 + $0x2] sm:$0x3]
    %vm25 = vcmask 1041408
    %v26 = vsel %vm25, %v23, inf
    %v27 = vrot.slane %v26, 4
    %v28 = vmin.f32 %v26, %v27
    %v29 = vrot.slane %v28, 2
    %v30 = vmin.f32 %v28, %v29
    %v31 = vrot.slane %v30, 1
    %v32 = vmin.f32 %v30, %v31
    %v33 = vsel %vm25, %v24, inf
    %v34 = vrot.slane %v33, 4
    %v35 = vmin.f32 %v33, %v34
    %v36 = vrot.slane %v35, 2
    %v37 = vmin.f32 %v35, %v36
    %v38 = vrot.slane %v37, 1
    %v39 = vmin.f32 %v37, %v38
    %p40 = scmp.eq.s32.totalorder 0, 0
    // Predicated region
    $region10: #{tpu_custom_call.1} parent=1 // pred_check
      %p41 = pneg %p40
    $region11: #{tpu_custom_call.1} parent=1 // pred_check_branch
      %43 = sbr.rel (%p41) target = $region13
    $region12: #{tpu_custom_call.1} parent=1 // pred_region
      %vm46 = vcmask 1041409
      %v47 = vsel %vm46, %v39, %v32
      %49 = vst [vmem:[#allocation5] sm:$0x3] %v47
    $region13: #{tpu_custom_call.1} parent=1 // pred_fallthru
      _
    %p50 = scmp.gt.s32.totalorder 0, 0
    // Predicated region
    $region14: #{tpu_custom_call.1} parent=1 // pred_check
      %p51 = pneg %p50
    $region15: #{tpu_custom_call.1} parent=1 // pred_check_branch
      %53 = sbr.rel (%p51) target = $region17
    $region16: #{tpu_custom_call.1} parent=1 // pred_region
      %v54 = vld [vmem:[#allocation5] sm:$0x3]
      %vm57 = vcmask 1041409
      %v58 = vsel %vm57, %v39, %v32
      %v60 = vmin.f32 %v54, %v58
      %61 = vst [vmem:[#allocation5] sm:$0x3] %v60
    $region17: #{tpu_custom_call.1} parent=1 // pred_fallthru
      _
    // Predicated region
    $region18: #{tpu_custom_call.1} parent=1 // pred_check
      _
    $region19: #{tpu_custom_call.1} parent=1 // pred_check_branch
      %63 = sbr.rel (0) target = $region21
    $region20: #{tpu_custom_call.1} parent=1 // pred_region
      %s65 = ssub.s32 32, 32
      %66 = vsyncadd [#allocation4], %s65
      %s68 = sshll.u32 [#allocation5], 4
      %s69 = int_to_ptr.vmem [resolvable:$true] %s68
      %71 = dma.vmem_to_hbm [thread:$0]  %s69, 32, %s1, [#allocation4]
    $region21: #{tpu_custom_call.1} parent=1 // pred_fallthru
      _
    // Predicated region
    $region22: #{tpu_custom_call.1} parent=1 // pred_check
      _
    $region23: #{tpu_custom_call.1} parent=1 // pred_check_branch
      %73 = sbr.rel (0) target = $region25
    $region24: #{tpu_custom_call.1} parent=1 // pred_region
      %74 = dma.done [#allocation4], 32
    $region25: #{tpu_custom_call.1} parent=1 // pred_fallthru
      _
    %75 = vsyncpa [#allocation3], 1
    %76 = vsyncpa [#allocation4], 1

</llo_original>
